<compile_context>
chip_gen: v7x
topology: tpu7x:2x2x1
jax: 0.10.0
libtpu: 0.0.40
codegen_flags: <defaults>
</compile_context>

<pallas_src>
import functools

import jax
import jax.numpy as jnp
from jax.experimental import pallas as pl
from jax.experimental.pallas import tpu as pltpu


def _layernorm_sub_kernel(dim_ref, x_ref, w_ref, b_ref, o_ref, *,
                          embed, groups, eps, apply_ln):
    """Fused slice -> (optional) LayerNorm -> zero-pad.

    dim_ref : SMEM (1,) int32   -- sampled_in_dim (runtime scalar)
    x_ref   : (tile_rows, groups * embed) -- `groups` original rows per kernel row
    w_ref   : (1, embed)        -- raw (unsliced) LayerNorm weight
    b_ref   : (1, embed)        -- raw (unsliced) LayerNorm bias
    o_ref   : (tile_rows, groups * embed)
    """
    dim = dim_ref[0]
    x = x_ref[...]
    rows = x.shape[0]

    if not apply_ln:
        # Identity path: slice + zero-pad only (lanes >= sampled_in_dim -> 0).
        col = jax.lax.broadcasted_iota(jnp.int32, x.shape, 1)
        local = col % embed if groups > 1 else col
        mask = local < dim
        o_ref[...] = jnp.where(mask, x, jnp.zeros((), x.dtype)).astype(o_ref.dtype)
        return

    xf = x.astype(jnp.float32)
    inv_n = 1.0 / dim.astype(jnp.float32)
    epsf = jnp.float32(eps)

    # Mask raw weight/bias in-kernel (replaces wrapper-side jnp.where ops).
    # Padded lanes get w = b = 0, so the final result is exactly 0 there and no
    # extra output mask / masked store is needed.
    wcol = jax.lax.broadcasted_iota(jnp.int32, (1, embed), 1)
    wvalid = wcol < dim
    w = jnp.where(wvalid, w_ref[...].astype(jnp.float32), 0.0)
    b = jnp.where(wvalid, b_ref[...].astype(jnp.float32), 0.0)

    # Per-segment validity mask (same for every one of the `groups` segments).
    colE = jax.lax.broadcasted_iota(jnp.int32, (rows, embed), 1)
    maskE = colE < dim

    outs = []
    for s in range(groups):
        xs = xf[:, s * embed:(s + 1) * embed] if groups > 1 else xf
        xm = jnp.where(maskE, xs, 0.0)
        mean = jnp.sum(xm, axis=-1, keepdims=True) * inv_n
        diff = jnp.where(maskE, xs - mean, 0.0)
        var = jnp.sum(diff * diff, axis=-1, keepdims=True) * inv_n
        inv = jax.lax.rsqrt(var + epsf)
        # diff == 0 and w == b == 0 in padded lanes -> result exactly 0 there.
        outs.append(diff * inv * w + b)

    y = outs[0] if groups == 1 else jnp.concatenate(outs, axis=-1)
    o_ref[...] = y.astype(o_ref.dtype)


def _round_up(v, m):
    return ((v + m - 1) // m) * m


def layernorm_sub_forward(x, weight, bias, *, sampled_in_dim, super_embed_dim,
                          normalize_before, before=False, after=False,
                          eps=1e-5, target_block_bytes=2 * 1024 * 1024):
    """Pallas implementation of LayerNormSub.forward.

    x:      [B, S, super_embed_dim]
    weight: [super_embed_dim]   (full super-net LayerNorm weight)
    bias:   [super_embed_dim]   (full super-net LayerNorm bias)
    """
    assert before ^ after
    apply_ln = bool(after ^ normalize_before)

    B, S, E = x.shape
    assert E == super_embed_dim
    assert weight.shape == (E,) and bias.shape == (E,)
    N = B * S

    # --- lane-dense grouping for small embed dims --------------------------
    # E < 128 wastes (128-E)/128 of every vreg lane and forces masked partial
    # stores. Pack k = 128 // E consecutive rows into one kernel row of width
    # k*E == 128 so each block is fully lane-dense.
    if E < 128 and 128 % E == 0:
        k = 128 // E
    else:
        k = 1
    L = k * E

    itemsize = x.dtype.itemsize
    row_mult = max(8, 32 // itemsize)        # sublane multiple (8 f32, 16 bf16)
    row_bytes = L * itemsize

    # --- byte-budgeted row tile --------------------------------------------
    # Pure HBM streaming: target ~target_block_bytes of x per block to amortize
    # the ~0.35us per-step overhead, but keep >= ~4 grid steps when the data is
    # big enough so the "parallel" axis can shard across TensorCores.
    G = pl.cdiv(N, k)                                    # grouped rows needed
    budget_rows = max(row_mult,
                      (target_block_bytes // row_bytes) // row_mult * row_mult)
    step_cap = _round_up(pl.cdiv(G, 4), row_mult)
    tile_rows = max(row_mult, min(budget_rows, step_cap))
    G_pad = _round_up(G, tile_rows)
    N_pad = G_pad * k

    x2 = x.reshape(N, E)
    if N_pad != N:
        # Zero-pad rows so the grid tiles exactly; padded rows are dropped below.
        x2 = jnp.pad(x2, ((0, N_pad - N), (0, 0)))
    xg = x2.reshape(G_pad, L)

    w2 = weight.reshape(1, E)
    b2 = bias.reshape(1, E)
    # Runtime scalar (SMEM prefetch): one compiled kernel for every sampled dim.
    dim_arr = jnp.asarray(sampled_in_dim, dtype=jnp.int32).reshape(1)

    kernel = functools.partial(
        _layernorm_sub_kernel,
        embed=E, groups=k, eps=float(eps), apply_ln=apply_ln)

    # Double-buffered in + out tiles plus weight/bias and slack; safe on all of
    # v5e (128 MiB phys), v6e (128 MiB), v7x (64 MiB phys / 32 MiB scoped).
    block_bytes = tile_rows * L * itemsize
    vmem_limit = int(min(max(6 * block_bytes, 32 * 1024 * 1024),
                         48 * 1024 * 1024))

    grid = (G_pad // tile_rows,)

    out = pl.pallas_call(
        kernel,
        out_shape=jax.ShapeDtypeStruct((G_pad, L), x.dtype),
        grid_spec=pltpu.PrefetchScalarGridSpec(
            num_scalar_prefetch=1,
            grid=grid,
            in_specs=[
                pl.BlockSpec((tile_rows, L), lambda i, dim: (i, 0)),
                pl.BlockSpec((1, E), lambda i, dim: (0, 0)),
                pl.BlockSpec((1, E), lambda i, dim: (0, 0)),
            ],
            out_specs=pl.BlockSpec((tile_rows, L), lambda i, dim: (i, 0)),
        ),
        compiler_params=pltpu.CompilerParams(
            dimension_semantics=("parallel",),
            vmem_limit_bytes=vmem_limit),
    )(dim_arr, xg, w2, b2)

    return out.reshape(N_pad, E)[:N].reshape(B, S, E)


def _reference(x, weight, bias, *, sampled_in_dim, super_embed_dim,
               normalize_before, before, after, eps=1e-5):
    """Pure-JAX reference mirroring the PyTorch module."""
    assert before ^ after
    xs = x[:, :, :sampled_in_dim]
    if after ^ normalize_before:
        w = weight[:sampled_in_dim]
        b = bias[:sampled_in_dim]
        mean = jnp.mean(xs, axis=-1, keepdims=True)
        var = jnp.mean((xs - mean) ** 2, axis=-1, keepdims=True)
        xs = (xs - mean) / jnp.sqrt(var + eps) * w + b
    pad = super_embed_dim - xs.shape[-1]
    if pad > 0:
        xs = jnp.pad(xs, ((0, 0), (0, 0), (0, pad)))
    return xs


if __name__ == "__main__":
    key = jax.random.PRNGKey(0)
    k1, k2 = jax.random.split(key)

    # Case 1: small embed (E=32 < 128 -> lane-dense grouped path), LN applied.
    B, S, E = 2, 8, 32
    sampled = 24
    x = jax.random.normal(k1, (B, S, E), dtype=jnp.float32)
    weight = 1.0 + 0.01 * jnp.arange(E, dtype=jnp.float32)
    bias = -0.02 * jnp.arange(E, dtype=jnp.float32)

    out = layernorm_sub_forward(
        x, weight, bias, sampled_in_dim=sampled, super_embed_dim=E,
        normalize_before=True, before=True, after=False)
    out = jax.block_until_ready(out)
    ref = _reference(x, weight, bias, sampled_in_dim=sampled,
                     super_embed_dim=E, normalize_before=True,
                     before=True, after=False)
    assert out.shape == (B, S, E)
    assert jnp.allclose(out, ref, atol=1e-5, rtol=1e-5), \
        float(jnp.max(jnp.abs(out - ref)))

    # Case 2: identity path (after ^ pre_norm == False): slice + zero-pad only.
    out2 = layernorm_sub_forward(
        x, weight, bias, sampled_in_dim=sampled, super_embed_dim=E,
        normalize_before=True, before=False, after=True)
    out2 = jax.block_until_ready(out2)
    ref2 = _reference(x, weight, bias, sampled_in_dim=sampled,
                      super_embed_dim=E, normalize_before=True,
                      before=False, after=True)
    assert jnp.allclose(out2, ref2, atol=1e-6, rtol=1e-6), \
        float(jnp.max(jnp.abs(out2 - ref2)))

    # Case 3: wider embed (E=192 -> ungrouped path), B*S not a tile multiple.
    B3, S3, E3 = 2, 7, 192
    sampled3 = 160
    x3 = jax.random.normal(k2, (B3, S3, E3), dtype=jnp.float32)
    w3 = 1.0 + 0.005 * jnp.arange(E3, dtype=jnp.float32)
    b3 = 0.01 * jnp.arange(E3, dtype=jnp.float32)
    out3 = layernorm_sub_forward(
        x3, w3, b3, sampled_in_dim=sampled3, super_embed_dim=E3,
        normalize_before=False, before=False, after=True)
    out3 = jax.block_until_ready(out3)
    ref3 = _reference(x3, w3, b3, sampled_in_dim=sampled3,
                      super_embed_dim=E3, normalize_before=False,
                      before=False, after=True)
    assert jnp.allclose(out3, ref3, atol=1e-5, rtol=1e-5), \
        float(jnp.max(jnp.abs(out3 - ref3)))

    print("KERNEL_OK")
</pallas_src>

<mosaic_0001>
module attributes {stable_mosaic.version = 11 : i64} {
  func.func @_layernorm_sub_kernel(%arg0: i32, %arg1: memref<1xi32, #tpu.memory_space<smem>>, %arg2: memref<8x128xf32, #tpu.memory_space<vmem>>, %arg3: memref<1x32xf32, #tpu.memory_space<vmem>>, %arg4: memref<1x32xf32, #tpu.memory_space<vmem>>, %arg5: memref<8x128xf32, #tpu.memory_space<vmem>>) attributes {dimension_semantics = [#tpu.dimension_semantics<parallel>], iteration_bounds = array<i64: 1>, scalar_prefetch = 1 : i64, scratch_operands = 0 : i64, tpu.core_type = #tpu.core_type<tc>, window_params = [{transform_indices = @transform_0, window_bounds = array<i64: 8, 128>}, {pipeline_mode = #tpu.pipeline_mode<synchronous>, transform_indices = @transform_1, window_bounds = array<i64: 1, 32>}, {pipeline_mode = #tpu.pipeline_mode<synchronous>, transform_indices = @transform_2, window_bounds = array<i64: 1, 32>}, {transform_indices = @transform_3, window_bounds = array<i64: 8, 128>}]} {
    %c0 = arith.constant 0 : index
    %0 = memref.load %arg1[%c0] : memref<1xi32, #tpu.memory_space<smem>>
    %c0_0 = arith.constant 0 : index
    %c0_1 = arith.constant 0 : index
    %1 = vector.load %arg2[%c0_0, %c0_1] : memref<8x128xf32, #tpu.memory_space<vmem>>, vector<8x128xf32>
    %2 = arith.sitofp %0 : i32 to f32
    %cst = arith.constant 1.000000e+00 : f32
    %3 = arith.divf %cst, %2 : f32
    %4 = tpu.iota {dimensions = array<i32: 1>} : vector<1x32xi32>
    %5 = vector.broadcast %0 : i32 to vector<1x32xi32>
    %6 = arith.cmpi slt, %4, %5 : vector<1x32xi32>
    %c0_2 = arith.constant 0 : index
    %c0_3 = arith.constant 0 : index
    %7 = vector.load %arg3[%c0_2, %c0_3] : memref<1x32xf32, #tpu.memory_space<vmem>>, vector<1x32xf32>
    %cst_4 = arith.constant 0.000000e+00 : f32
    %8 = vector.broadcast %cst_4 : f32 to vector<1x32xf32>
    %9 = arith.select %6, %7, %8 : vector<1x32xi1>, vector<1x32xf32>
    %c0_5 = arith.constant 0 : index
    %c0_6 = arith.constant 0 : index
    %10 = vector.load %arg4[%c0_5, %c0_6] : memref<1x32xf32, #tpu.memory_space<vmem>>, vector<1x32xf32>
    %cst_7 = arith.constant 0.000000e+00 : f32
    %11 = vector.broadcast %cst_7 : f32 to vector<1x32xf32>
    %12 = arith.select %6, %10, %11 : vector<1x32xi1>, vector<1x32xf32>
    %13 = tpu.iota {dimensions = array<i32: 1>} : vector<8x32xi32>
    %14 = vector.broadcast %0 : i32 to vector<8x32xi32>
    %15 = arith.cmpi slt, %13, %14 : vector<8x32xi32>
    %16 = vector.extract_strided_slice %1 {offsets = [0, 0], sizes = [8, 32], strides = [1, 1]} : vector<8x128xf32> to vector<8x32xf32>
    %cst_8 = arith.constant 0.000000e+00 : f32
    %17 = vector.broadcast %cst_8 : f32 to vector<8x32xf32>
    %18 = arith.select %15, %16, %17 : vector<8x32xi1>, vector<8x32xf32>
    %cst_9 = arith.constant dense<0.000000e+00> : vector<8xf32>
    %19 = vector.multi_reduction <add>, %18, %cst_9 [1] : vector<8x32xf32> to vector<8xf32>
    %20 = vector.shape_cast %19 : vector<8xf32> to vector<8x1xf32>
    %21 = vector.broadcast %3 : f32 to vector<8x1xf32>
    %22 = arith.mulf %20, %21 : vector<8x1xf32>
    %23 = vector.broadcast %22 : vector<8x1xf32> to vector<8x32xf32>
    %24 = arith.subf %16, %23 : vector<8x32xf32>
    %cst_10 = arith.constant 0.000000e+00 : f32
    %25 = vector.broadcast %cst_10 : f32 to vector<8x32xf32>
    %26 = arith.select %15, %24, %25 : vector<8x32xi1>, vector<8x32xf32>
    %27 = arith.mulf %26, %26 : vector<8x32xf32>
    %cst_11 = arith.constant dense<0.000000e+00> : vector<8xf32>
    %28 = vector.multi_reduction <add>, %27, %cst_11 [1] : vector<8x32xf32> to vector<8xf32>
    %29 = vector.shape_cast %28 : vector<8xf32> to vector<8x1xf32>
    %30 = vector.broadcast %3 : f32 to vector<8x1xf32>
    %31 = arith.mulf %29, %30 : vector<8x1xf32>
    %cst_12 = arith.constant 9.99999974E-6 : f32
    %32 = vector.broadcast %cst_12 : f32 to vector<8x1xf32>
    %33 = arith.addf %31, %32 : vector<8x1xf32>
    %34 = math.rsqrt %33 : vector<8x1xf32>
    %35 = vector.broadcast %34 : vector<8x1xf32> to vector<8x32xf32>
    %36 = arith.mulf %26, %35 : vector<8x32xf32>
    %37 = vector.broadcast %9 : vector<1x32xf32> to vector<8x32xf32>
    %38 = arith.mulf %36, %37 : vector<8x32xf32>
    %39 = vector.broadcast %12 : vector<1x32xf32> to vector<8x32xf32>
    %40 = arith.addf %38, %39 : vector<8x32xf32>
    %41 = vector.extract_strided_slice %1 {offsets = [0, 32], sizes = [8, 32], strides = [1, 1]} : vector<8x128xf32> to vector<8x32xf32>
    %cst_13 = arith.constant 0.000000e+00 : f32
    %42 = vector.broadcast %cst_13 : f32 to vector<8x32xf32>
    %43 = arith.select %15, %41, %42 : vector<8x32xi1>, vector<8x32xf32>
    %cst_14 = arith.constant dense<0.000000e+00> : vector<8xf32>
    %44 = vector.multi_reduction <add>, %43, %cst_14 [1] : vector<8x32xf32> to vector<8xf32>
    %45 = vector.shape_cast %44 : vector<8xf32> to vector<8x1xf32>
    %46 = vector.broadcast %3 : f32 to vector<8x1xf32>
    %47 = arith.mulf %45, %46 : vector<8x1xf32>
    %48 = vector.broadcast %47 : vector<8x1xf32> to vector<8x32xf32>
    %49 = arith.subf %41, %48 : vector<8x32xf32>
    %cst_15 = arith.constant 0.000000e+00 : f32
    %50 = vector.broadcast %cst_15 : f32 to vector<8x32xf32>
    %51 = arith.select %15, %49, %50 : vector<8x32xi1>, vector<8x32xf32>
    %52 = arith.mulf %51, %51 : vector<8x32xf32>
    %cst_16 = arith.constant dense<0.000000e+00> : vector<8xf32>
    %53 = vector.multi_reduction <add>, %52, %cst_16 [1] : vector<8x32xf32> to vector<8xf32>
    %54 = vector.shape_cast %53 : vector<8xf32> to vector<8x1xf32>
    %55 = vector.broadcast %3 : f32 to vector<8x1xf32>
    %56 = arith.mulf %54, %55 : vector<8x1xf32>
    %cst_17 = arith.constant 9.99999974E-6 : f32
    %57 = vector.broadcast %cst_17 : f32 to vector<8x1xf32>
    %58 = arith.addf %56, %57 : vector<8x1xf32>
    %59 = math.rsqrt %58 : vector<8x1xf32>
    %60 = vector.broadcast %59 : vector<8x1xf32> to vector<8x32xf32>
    %61 = arith.mulf %51, %60 : vector<8x32xf32>
    %62 = vector.broadcast %9 : vector<1x32xf32> to vector<8x32xf32>
    %63 = arith.mulf %61, %62 : vector<8x32xf32>
    %64 = vector.broadcast %12 : vector<1x32xf32> to vector<8x32xf32>
    %65 = arith.addf %63, %64 : vector<8x32xf32>
    %66 = vector.extract_strided_slice %1 {offsets = [0, 64], sizes = [8, 32], strides = [1, 1]} : vector<8x128xf32> to vector<8x32xf32>
    %cst_18 = arith.constant 0.000000e+00 : f32
    %67 = vector.broadcast %cst_18 : f32 to vector<8x32xf32>
    %68 = arith.select %15, %66, %67 : vector<8x32xi1>, vector<8x32xf32>
    %cst_19 = arith.constant dense<0.000000e+00> : vector<8xf32>
    %69 = vector.multi_reduction <add>, %68, %cst_19 [1] : vector<8x32xf32> to vector<8xf32>
    %70 = vector.shape_cast %69 : vector<8xf32> to vector<8x1xf32>
    %71 = vector.broadcast %3 : f32 to vector<8x1xf32>
    %72 = arith.mulf %70, %71 : vector<8x1xf32>
    %73 = vector.broadcast %72 : vector<8x1xf32> to vector<8x32xf32>
    %74 = arith.subf %66, %73 : vector<8x32xf32>
    %cst_20 = arith.constant 0.000000e+00 : f32
    %75 = vector.broadcast %cst_20 : f32 to vector<8x32xf32>
    %76 = arith.select %15, %74, %75 : vector<8x32xi1>, vector<8x32xf32>
    %77 = arith.mulf %76, %76 : vector<8x32xf32>
    %cst_21 = arith.constant dense<0.000000e+00> : vector<8xf32>
    %78 = vector.multi_reduction <add>, %77, %cst_21 [1] : vector<8x32xf32> to vector<8xf32>
    %79 = vector.shape_cast %78 : vector<8xf32> to vector<8x1xf32>
    %80 = vector.broadcast %3 : f32 to vector<8x1xf32>
    %81 = arith.mulf %79, %80 : vector<8x1xf32>
    %cst_22 = arith.constant 9.99999974E-6 : f32
    %82 = vector.broadcast %cst_22 : f32 to vector<8x1xf32>
    %83 = arith.addf %81, %82 : vector<8x1xf32>
    %84 = math.rsqrt %83 : vector<8x1xf32>
    %85 = vector.broadcast %84 : vector<8x1xf32> to vector<8x32xf32>
    %86 = arith.mulf %76, %85 : vector<8x32xf32>
    %87 = vector.broadcast %9 : vector<1x32xf32> to vector<8x32xf32>
    %88 = arith.mulf %86, %87 : vector<8x32xf32>
    %89 = vector.broadcast %12 : vector<1x32xf32> to vector<8x32xf32>
    %90 = arith.addf %88, %89 : vector<8x32xf32>
    %91 = vector.extract_strided_slice %1 {offsets = [0, 96], sizes = [8, 32], strides = [1, 1]} : vector<8x128xf32> to vector<8x32xf32>
    %cst_23 = arith.constant 0.000000e+00 : f32
    %92 = vector.broadcast %cst_23 : f32 to vector<8x32xf32>
    %93 = arith.select %15, %91, %92 : vector<8x32xi1>, vector<8x32xf32>
    %cst_24 = arith.constant dense<0.000000e+00> : vector<8xf32>
    %94 = vector.multi_reduction <add>, %93, %cst_24 [1] : vector<8x32xf32> to vector<8xf32>
    %95 = vector.shape_cast %94 : vector<8xf32> to vector<8x1xf32>
    %96 = vector.broadcast %3 : f32 to vector<8x1xf32>
    %97 = arith.mulf %95, %96 : vector<8x1xf32>
    %98 = vector.broadcast %97 : vector<8x1xf32> to vector<8x32xf32>
    %99 = arith.subf %91, %98 : vector<8x32xf32>
    %cst_25 = arith.constant 0.000000e+00 : f32
    %100 = vector.broadcast %cst_25 : f32 to vector<8x32xf32>
    %101 = arith.select %15, %99, %100 : vector<8x32xi1>, vector<8x32xf32>
    %102 = arith.mulf %101, %101 : vector<8x32xf32>
    %cst_26 = arith.constant dense<0.000000e+00> : vector<8xf32>
    %103 = vector.multi_reduction <add>, %102, %cst_26 [1] : vector<8x32xf32> to vector<8xf32>
    %104 = vector.shape_cast %103 : vector<8xf32> to vector<8x1xf32>
    %105 = vector.broadcast %3 : f32 to vector<8x1xf32>
    %106 = arith.mulf %104, %105 : vector<8x1xf32>
    %cst_27 = arith.constant 9.99999974E-6 : f32
    %107 = vector.broadcast %cst_27 : f32 to vector<8x1xf32>
    %108 = arith.addf %106, %107 : vector<8x1xf32>
    %109 = math.rsqrt %108 : vector<8x1xf32>
    %110 = vector.broadcast %109 : vector<8x1xf32> to vector<8x32xf32>
    %111 = arith.mulf %101, %110 : vector<8x32xf32>
    %112 = vector.broadcast %9 : vector<1x32xf32> to vector<8x32xf32>
    %113 = arith.mulf %111, %112 : vector<8x32xf32>
    %114 = vector.broadcast %12 : vector<1x32xf32> to vector<8x32xf32>
    %115 = arith.addf %113, %114 : vector<8x32xf32>
    %116 = tpu.concatenate %40, %65, %90, %115 in 1 : vector<8x32xf32>, vector<8x32xf32>, vector<8x32xf32>, vector<8x32xf32> -> vector<8x128xf32>
    %c0_28 = arith.constant 0 : index
    %c0_29 = arith.constant 0 : index
    %117 = vector.load %arg5[%c0_28, %c0_29] : memref<8x128xf32, #tpu.memory_space<vmem>>, vector<8x128xf32>
    tpu.vector_store %arg5[%c0_28, %c0_29], %116 {strides = array<i32>} : memref<8x128xf32, #tpu.memory_space<vmem>>, vector<8x128xf32>,
    return
  }
  func.func @transform_0(%arg0: i32, %arg1: memref<1xi32, #tpu.memory_space<smem>>) -> (i32, i32) {
    %c0_i32 = arith.constant 0 : i32
    %c0_i32_0 = arith.constant 0 : i32
    return %arg0, %c0_i32 : i32, i32
  }
  func.func @transform_1(%arg0: i32, %arg1: memref<1xi32, #tpu.memory_space<smem>>) -> (i32, i32) {
    %c0_i32 = arith.constant 0 : i32
    %c0_i32_0 = arith.constant 0 : i32
    %c0_i32_1 = arith.constant 0 : i32
    return %c0_i32, %c0_i32_0 : i32, i32
  }
  func.func @transform_2(%arg0: i32, %arg1: memref<1xi32, #tpu.memory_space<smem>>) -> (i32, i32) {
    %c0_i32 = arith.constant 0 : i32
    %c0_i32_0 = arith.constant 0 : i32
    %c0_i32_1 = arith.constant 0 : i32
    return %c0_i32, %c0_i32_0 : i32, i32
  }
  func.func @transform_3(%arg0: i32, %arg1: memref<1xi32, #tpu.memory_space<smem>>) -> (i32, i32) {
    %c0_i32 = arith.constant 0 : i32
    %c0_i32_0 = arith.constant 0 : i32
    return %arg0, %c0_i32 : i32, i32
  }
}

</mosaic_0001>

<llo_original>
// kernel: tpu_custom_call.1
$region0: #{tpu_custom_call.1}
  #allocation0 [shape = 'u32[]', space=smem, size = 0x4, offset = 0x4, fixed_abs, tag = 'smem constant byte address 0x4 - core index']
  #allocation1 [shape = 'u32[144,128]{1,0:T(1,128)}', space=vmem, size = 0x12000, scoped, tag = 'internal scratch']
  #allocation2 [shape = 's32[1]{0}', space=sflag, size = 0x4, scoped, tag = 'scoped memory for tpu_custom_call.1']
  #allocation3 [shape = 's32[1]{0:T(128)S(6)}', space=smem, size = 0x200, scoped, tag = 'prefetched SMEM operand 0']
  %s0 = inlined_call_operand.<no memory space> [shape: s32[1], index: 0, kind: input, shape index: {}]
  %s1 = inlined_call_operand.hbm [shape: f32[8,128], index: 1, kind: input, shape index: {}]
  %s2 = inlined_call_operand.vmem [shape: f32[1,32], index: 2, kind: input, shape index: {}]
  %s3 = inlined_call_operand.vmem [shape: f32[1,32], index: 3, kind: input, shape index: {}]
  %s4 = inlined_call_operand.hbm [shape: f32[8,128], index: 4, kind: output, shape index: {}]
  %s5 = sld [smem:[#allocation0]]
  $region26: #{tpu_custom_call.1} parent=0
    _
  %s7 = ssub.s32 1, %s5
  %s8 = scalar_select 0, %s7, %s5
  %9 = sst [smem:[#allocation3]] %s0
  $region1: #{tpu_custom_call.1} parent=0
    #allocation4 [shape = 'u8[4096]{0}', space=vmem, size = 0x1000, scoped, tag = 'input window, operand 1, single buffered']
    #allocation5 [shape = 's32[1]{0}', space=sflag, size = 0x4, scoped, tag = 'scoped memory for tpu_custom_call.1']
    #allocation6 [shape = 's32[1]{0}', space=sflag, size = 0x4, scoped, tag = 'scoped memory for tpu_custom_call.1']
    #allocation7 [shape = 'u8[4096]{0}', space=vmem, size = 0x1000, scoped, tag = 'output window, operand 0, single buffered']
    %10 = vsyncpa [#allocation5], 0
    %11 = vsyncpa [#allocation6], 0
    // Predicated region
    $region2: #{tpu_custom_call.1} parent=1 // pred_check
      _
    $region3: #{tpu_custom_call.1} parent=1 // pred_check_branch
      %13 = sbr.rel (0) target = $region5
    $region4: #{tpu_custom_call.1} parent=1 // pred_region
      %s15 = ssub.s32 128, 128
      %16 = vsyncadd [#allocation5], %s15
      %s18 = sshll.u32 [#allocation4], 4
      %s19 = int_to_ptr.vmem [resolvable:$true] %s18
      %21 = dma.hbm_to_vmem [thread:$0]  %s1, 128, %s19, [#allocation5]
    $region5: #{tpu_custom_call.1} parent=1 // pred_fallthru
      _
    // Predicated region
    $region6: #{tpu_custom_call.1} parent=1 // pred_check
      _
    $region7: #{tpu_custom_call.1} parent=1 // pred_check_branch
      %23 = sbr.rel (0) target = $region9
    $region8: #{tpu_custom_call.1} parent=1 // pred_region
      _
    $region9: #{tpu_custom_call.1} parent=1 // pred_fallthru
      _
    // Predicated region
    $region10: #{tpu_custom_call.1} parent=1 // pred_check
      _
    $region11: #{tpu_custom_call.1} parent=1 // pred_check_branch
      %25 = sbr.rel (0) target = $region13
    $region12: #{tpu_custom_call.1} parent=1 // pred_region
      _
    $region13: #{tpu_custom_call.1} parent=1 // pred_fallthru
      _
    // Predicated region
    $region14: #{tpu_custom_call.1} parent=1 // pred_check
      _
    $region15: #{tpu_custom_call.1} parent=1 // pred_check_branch
      %27 = sbr.rel (0) target = $region17
    $region16: #{tpu_custom_call.1} parent=1 // pred_region
      %28 = dma.done [#allocation5], 128
    $region17: #{tpu_custom_call.1} parent=1 // pred_fallthru
      _
    %s29 = sld [smem:[#allocation3]]
    %v30 = vld [vmem:[#allocation4] sm:$0xff]
    %s31 = scvt.s32.f32 %s29
    %v32 = vstv %s31
    %v33 = vrcp.pop %v32
    %s34 = vtos %v33
    %v35 = vlaneseq
    %v36 = vand.u32 %v35, 127
    %v37 = vstv %s29
    %vm38 = vcmp.lt.s32.totalorder %v36, %v37
    %v39 = vld [vmem:[%s2] sm:$0x1]
    %v40 = vsel %vm38, %v39, 0.0
    %v41 = vld [vmem:[%s3] sm:$0x1]
    %v42 = vsel %vm38, %v41, 0.0
    %v43 = vsel %vm38, %v30, 0.0
    %vm44 = vcmask 261120
    %v45 = vsel %vm44, %v43, 0.0
    %46 = vadd.xlane.f32.xlu0 %v45
    %v47 = vpop.xlane.xlu0 %46
    %v48 = vstv %s34
    %v49 = vmul.f32 %v47, %v48
    %v50 = vsub.f32 %v30, %v49
    %v51 = vsel %vm38, %v50, 0.0
    %v52 = vmul.f32 %v51, %v51
    %v53 = vsel %vm44, %v52, 0.0
    %54 = vadd.xlane.f32.xlu0 %v53
    %v55 = vpop.xlane.xlu0 %54
    %v56 = vmul.f32 %v55, %v48
    %v57 = vadd.f32 %v56, 1e-05
    %v58 = vrsqrt.pop %v57
    %v59 = vmul.f32 %v51, %v58
    %v60 = vlaneseq
    %v61 = vshrl.u32 %v60, 7
    %v62 = vsub.s32 0, %v61
    %v63 = vrot.slane %v40, %v62
    %v64 = vmul.f32 %v59, %v63
    %v65 = vlaneseq
    %v66 = vshrl.u32 %v65, 7
    %v67 = vsub.s32 0, %v66
    %v68 = vrot.slane %v42, %v67
    %v69 = vadd.f32 %v64, %v68
    %71 = vrot.lane.b32.xlu0 %v30, 96
    %v72 = vpop.permute.xlu0 %71
    %v74 = vsel %vm38, %v72, 0.0
    %v75 = vsel %vm44, %v74, 0.0
    %76 = vadd.xlane.f32.xlu0 %v75
    %v77 = vpop.xlane.xlu0 %76
    %v78 = vmul.f32 %v77, %v48
    %v79 = vsub.f32 %v30, %v78
    %81 = vrot.lane.b32.xlu0 %v79, 96
    %v82 = vpop.permute.xlu0 %81
    %v84 = vsel %vm38, %v82, 0.0
    %v85 = vmul.f32 %v84, %v84
    %v86 = vsel %vm44, %v85, 0.0
    %87 = vadd.xlane.f32.xlu0 %v86
    %v88 = vpop.xlane.xlu0 %87
    %v89 = vmul.f32 %v88, %v48
    %v90 = vadd.f32 %v89, 1e-05
    %v91 = vrsqrt.pop %v90
    %v92 = vmul.f32 %v84, %v91
    %v93 = vmul.f32 %v92, %v63
    %v94 = vadd.f32 %v93, %v68
    %95 = vrot.lane.b32.xlu0 %v30, 64
    %v96 = vpop.permute.xlu0 %95
    %v98 = vsel %vm38, %v96, 0.0
    %v99 = vsel %vm44, %v98, 0.0
    %100 = vadd.xlane.f32.xlu0 %v99
    %v101 = vpop.xlane.xlu0 %100
    %v102 = vmul.f32 %v101, %v48
    %v103 = vsub.f32 %v30, %v102
    %105 = vrot.lane.b32.xlu0 %v103, 64
    %v106 = vpop.permute.xlu0 %105
    %v108 = vsel %vm38, %v106, 0.0
    %v109 = vmul.f32 %v108, %v108
    %v110 = vsel %vm44, %v109, 0.0
    %111 = vadd.xlane.f32.xlu0 %v110
    %v112 = vpop.xlane.xlu0 %111
    %v113 = vmul.f32 %v112, %v48
    %v114 = vadd.f32 %v113, 1e-05
    %v115 = vrsqrt.pop %v114
    %v116 = vmul.f32 %v108, %v115
    %v117 = vmul.f32 %v116, %v63
    %v118 = vadd.f32 %v117, %v68
    %119 = vrot.lane.b32.xlu0 %v30, 32
    %v120 = vpop.permute.xlu0 %119
    %v122 = vsel %vm38, %v120, 0.0
    %v123 = vsel %vm44, %v122, 0.0
    %124 = vadd.xlane.f32.xlu0 %v123
    %v125 = vpop.xlane.xlu0 %124
    %v126 = vmul.f32 %v125, %v48
    %v127 = vsub.f32 %v30, %v126
    %129 = vrot.lane.b32.xlu0 %v127, 32
    %v130 = vpop.permute.xlu0 %129
    %v132 = vsel %vm38, %v130, 0.0
    %v133 = vmul.f32 %v132, %v132
    %v134 = vsel %vm44, %v133, 0.0
    %135 = vadd.xlane.f32.xlu0 %v134
    %v136 = vpop.xlane.xlu0 %135
    %v137 = vmul.f32 %v136, %v48
    %v138 = vadd.f32 %v137, 1e-05
    %v139 = vrsqrt.pop %v138
    %v140 = vmul.f32 %v132, %v139
    %v141 = vmul.f32 %v140, %v63
    %v142 = vadd.f32 %v141, %v68
    %144 = vrot.lane.b32.xlu0 %v94, 32
    %v145 = vpop.permute.xlu0 %144
    %148 = vrot.lane.b32.xlu0 %v118, 64
    %v149 = vpop.permute.xlu0 %148
    %152 = vrot.lane.b32.xlu0 %v142, 96
    %v153 = vpop.permute.xlu0 %152
    %v155 = vsel %vm44, %v69, %v145
    %vm156 = vcmask 523264
    %v157 = vsel %vm156, %v155, %v149
    %vm158 = vcmask 785408
    %v159 = vsel %vm158, %v157, %v153
    %160 = vst [vmem:[#allocation7] sm:$0xff] %v159
    // Predicated region
    $region18: #{tpu_custom_call.1} parent=1 // pred_check
      _
    $region19: #{tpu_custom_call.1} parent=1 // pred_check_branch
      %162 = sbr.rel (0) target = $region21
    $region20: #{tpu_custom_call.1} parent=1 // pred_region
      %s164 = ssub.s32 128, 128
      %165 = vsyncadd [#allocation6], %s164
      %s167 = sshll.u32 [#allocation7], 4
      %s168 = int_to_ptr.vmem [resolvable:$true] %s167
      %170 = dma.vmem_to_hbm [thread:$0]  %s168, 128, %s4, [#allocation6]
    $region21: #{tpu_custom_call.1} parent=1 // pred_fallthru
      _
    // Predicated region
    $region22: #{tpu_custom_call.1} parent=1 // pred_check
      _
    $region23: #{tpu_custom_call.1} parent=1 // pred_check_branch
      %172 = sbr.rel (0) target = $region25
    $region24: #{tpu_custom_call.1} parent=1 // pred_region
      %173 = dma.done [#allocation6], 128
    $region25: #{tpu_custom_call.1} parent=1 // pred_fallthru
      _
    %174 = vsyncpa [#allocation5], 1
    %175 = vsyncpa [#allocation6], 1

</llo_original>
